<compile_context>
chip_gen: v6e
topology: v6e:2x2x1
jax: 0.10.0
libtpu: 0.0.40
codegen_flags: <defaults>
</compile_context>

<pallas_src>
import jax
import jax.numpy as jnp
from jax.experimental import pallas as pl
from jax.experimental.pallas import tpu as pltpu


def _round_up(x, m):
    return ((x + m - 1) // m) * m


def _choose_tiling(B, tile_b_max=512):
    """Return (tile_b, b_pad). b_pad is a multiple of tile_b.

    - B <= 32: single full-array block (no padding, block dims == array dims).
    - B  > 32: >= 2 steps, even step count (v7x 2-TC sharding), tile_b a
      multiple of 16 (bf16/f32 sublane friendly), capped at tile_b_max.
    """
    if B <= 32:
        return B, B
    n_steps = max(2, -(-B // tile_b_max))
    if n_steps % 2:
        n_steps += 1
    tile_b = _round_up(-(-B // n_steps), 16)
    return tile_b, n_steps * tile_b


def _q_network_kernel(x_ref, w1_ref, b1_ref, w2_ref, b2_ref, w3_ref, b3_ref, o_ref):
    # In-kernel f32 -> bf16 cast of the state (avoids a separate XLA pass).
    x = x_ref[...].astype(jnp.bfloat16)
    # fc1 + ReLU: bf16 MXU matmul, f32 accumulate; bias add / ReLU in f32 (VPU).
    h1 = jnp.dot(x, w1_ref[...], preferred_element_type=jnp.float32)
    h1 = jnp.maximum(h1 + b1_ref[...], 0.0)
    # fc2 + ReLU
    h2 = jnp.dot(h1.astype(jnp.bfloat16), w2_ref[...],
                 preferred_element_type=jnp.float32)
    h2 = jnp.maximum(h2 + b2_ref[...], 0.0)
    # fc3 (no activation), stored at its true width (masked vst, no dead lanes).
    h3 = jnp.dot(h2.astype(jnp.bfloat16), w3_ref[...],
                 preferred_element_type=jnp.float32)
    o_ref[...] = (h3 + b3_ref[...]).astype(o_ref.dtype)


def prepare_params(params):
    """One-time conversion: weights -> bf16 (MXU inputs), biases -> f32 (1, out)."""
    w1, b1, w2, b2, w3, b3 = params
    return (w1.astype(jnp.bfloat16), b1.astype(jnp.float32),
            w2.astype(jnp.bfloat16), b2.astype(jnp.float32),
            w3.astype(jnp.bfloat16), b3.astype(jnp.float32))


def q_network_forward(state, params, action_len, action_size, *,
                      tile_b_max=512, out_dtype=jnp.bfloat16):
    """state: (B, state_size) f32. Returns (B, action_len, action_size) out_dtype."""
    w1, b1, w2, b2, w3, b3 = params
    if w1.dtype != jnp.bfloat16:  # accept raw f32 params too; prefer prepare_params()
        w1, w2, w3 = (w.astype(jnp.bfloat16) for w in (w1, w2, w3))

    B, state_size = state.shape
    h1_dim = w1.shape[1]
    h2_dim = w2.shape[1]
    out_dim = w3.shape[1]
    assert out_dim == action_len * action_size

    tile_b, b_pad = _choose_tiling(B, tile_b_max)
    if b_pad != B:  # rare (non power-of-2 batch); common case has no wrapper pad
        state = jnp.pad(state, ((0, b_pad - B), (0, 0)))
    grid = (b_pad // tile_b,)

    def _const_spec(shape):
        nd = len(shape)
        return pl.BlockSpec(shape, lambda i, _nd=nd: (0,) * _nd)

    flops = 2 * b_pad * (state_size * h1_dim + h1_dim * h2_dim + h2_dim * out_dim)
    bytes_accessed = (
        b_pad * state_size * 4                                 # state read (f32)
        + (w1.size + w2.size + w3.size) * 2                    # bf16 weights
        + (b1.size + b2.size + b3.size) * 4                    # f32 biases
        + b_pad * out_dim * jnp.dtype(out_dtype).itemsize      # output write
    )

    out_padded = pl.pallas_call(
        _q_network_kernel,
        out_shape=jax.ShapeDtypeStruct((b_pad, out_dim), out_dtype),
        grid_spec=pltpu.PrefetchScalarGridSpec(
            num_scalar_prefetch=0,
            grid=grid,
            in_specs=[
                pl.BlockSpec((tile_b, state_size), lambda i: (i, 0)),
                _const_spec(w1.shape), _const_spec(b1.shape),
                _const_spec(w2.shape), _const_spec(b2.shape),
                _const_spec(w3.shape), _const_spec(b3.shape),
            ],
            out_specs=pl.BlockSpec((tile_b, out_dim), lambda i: (i, 0)),
        ),
        compiler_params=pltpu.CompilerParams(
            dimension_semantics=("parallel",),
        ),
        cost_estimate=pl.CostEstimate(
            flops=flops, transcendentals=0, bytes_accessed=bytes_accessed),
    )(state, w1, b1, w2, b2, w3, b3)

    out = out_padded if b_pad == B else out_padded[:B]
    return out.reshape(B, action_len, action_size)


# --------------------------- init + references ---------------------------

def init_params(key, state_size, hidden, action_size, action_len):
    """Deterministic synthetic f32 params. Weights (in, out); biases (1, out).

    y = x @ W + b here equals PyTorch's y = x @ W_pt.T + b (W_pt is (out, in)).
    """
    dims = [state_size, hidden[0], hidden[1], action_size * action_len]
    keys = jax.random.split(key, 6)
    params = []
    for i in range(3):
        fan_in = dims[i]
        bound = 1.0 / jnp.sqrt(fan_in)  # PyTorch Linear default init range
        w = jax.random.uniform(keys[2 * i], (dims[i], dims[i + 1]),
                               minval=-bound, maxval=bound, dtype=jnp.float32)
        b = jax.random.uniform(keys[2 * i + 1], (1, dims[i + 1]),
                               minval=-bound, maxval=bound, dtype=jnp.float32)
        params += [w, b]
    return tuple(params)


def q_network_ref_f32(state, params, action_len, action_size):
    """Pure-f32 reference matching the PyTorch module exactly."""
    w1, b1, w2, b2, w3, b3 = params
    x = jnp.maximum(state @ w1 + b1, 0.0)
    x = jnp.maximum(x @ w2 + b2, 0.0)
    x = x @ w3 + b3
    return x.reshape(-1, action_len, action_size)


def q_network_ref_bf16(state, params, action_len, action_size, out_dtype=jnp.bfloat16):
    """Precision-matched reference (bf16 MXU inputs, f32 accumulate, out_dtype store)."""
    w1, b1, w2, b2, w3, b3 = params
    x = state.astype(jnp.bfloat16)
    h1 = jnp.maximum(
        jnp.dot(x, w1.astype(jnp.bfloat16), preferred_element_type=jnp.float32) + b1, 0.0)
    h2 = jnp.maximum(
        jnp.dot(h1.astype(jnp.bfloat16), w2.astype(jnp.bfloat16),
                preferred_element_type=jnp.float32) + b2, 0.0)
    h3 = jnp.dot(h2.astype(jnp.bfloat16), w3.astype(jnp.bfloat16),
                 preferred_element_type=jnp.float32) + b3
    return h3.astype(out_dtype).reshape(-1, action_len, action_size)


if __name__ == "__main__":
    # Small shapes consistent with the module's forward.
    batch = 2
    state_size = 16
    hidden = [64, 64]
    action_size = 4
    action_len = 8

    key = jax.random.PRNGKey(0)
    k_state, k_params, k_state2 = jax.random.split(key, 3)
    params_f32 = init_params(k_params, state_size, hidden, action_size, action_len)
    params = prepare_params(params_f32)  # one-time bf16 weight cast

    fwd = jax.jit(q_network_forward,
                  static_argnames=("action_len", "action_size", "tile_b_max", "out_dtype"))

    # --- case 1: tiny batch (single full-array block, no padding) ---
    state = jax.random.normal(k_state, (batch, state_size), dtype=jnp.float32)
    out = jax.block_until_ready(
        fwd(state, params, action_len=action_len, action_size=action_size))
    assert out.shape == (batch, action_len, action_size)

    ref_bf = q_network_ref_bf16(state, params_f32, action_len, action_size)
    assert jnp.allclose(out.astype(jnp.float32), ref_bf.astype(jnp.float32),
                        atol=1e-2, rtol=1e-2)
    ref32 = q_network_ref_f32(state, params_f32, action_len, action_size)
    assert jnp.allclose(out.astype(jnp.float32), ref32, atol=5e-2, rtol=5e-2)

    # --- case 2: batch > 32 (>= 2 grid steps, ragged -> exercises pad + slice) ---
    batch2 = 100
    state2 = jax.random.normal(k_state2, (batch2, state_size), dtype=jnp.float32)
    out2 = jax.block_until_ready(
        fwd(state2, params, action_len=action_len, action_size=action_size))
    assert out2.shape == (batch2, action_len, action_size)
    ref_bf2 = q_network_ref_bf16(state2, params_f32, action_len, action_size)
    assert jnp.allclose(out2.astype(jnp.float32), ref_bf2.astype(jnp.float32),
                        atol=1e-2, rtol=1e-2)

    print("KERNEL_OK")
</pallas_src>

<mosaic_0001>
module attributes {stable_mosaic.version = 11 : i64} {
  func.func @_q_network_kernel(%arg0: i32, %arg1: memref<2x16xf32, #tpu.memory_space<vmem>>, %arg2: memref<16x64xbf16, #tpu.memory_space<vmem>>, %arg3: memref<1x64xf32, #tpu.memory_space<vmem>>, %arg4: memref<64x64xbf16, #tpu.memory_space<vmem>>, %arg5: memref<1x64xf32, #tpu.memory_space<vmem>>, %arg6: memref<64x32xbf16, #tpu.memory_space<vmem>>, %arg7: memref<1x32xf32, #tpu.memory_space<vmem>>, %arg8: memref<2x32xbf16, #tpu.memory_space<vmem>>) attributes {dimension_semantics = [#tpu.dimension_semantics<parallel>], iteration_bounds = array<i64: 1>, scalar_prefetch = 0 : i64, scratch_operands = 0 : i64, tpu.core_type = #tpu.core_type<tc>, window_params = [{transform_indices = @transform_0, window_bounds = array<i64: 2, 16>}, {pipeline_mode = #tpu.pipeline_mode<synchronous>, transform_indices = @transform_1, window_bounds = array<i64: 16, 64>}, {pipeline_mode = #tpu.pipeline_mode<synchronous>, transform_indices = @transform_2, window_bounds = array<i64: 1, 64>}, {pipeline_mode = #tpu.pipeline_mode<synchronous>, transform_indices = @transform_3, window_bounds = array<i64: 64, 64>}, {pipeline_mode = #tpu.pipeline_mode<synchronous>, transform_indices = @transform_4, window_bounds = array<i64: 1, 64>}, {pipeline_mode = #tpu.pipeline_mode<synchronous>, transform_indices = @transform_5, window_bounds = array<i64: 64, 32>}, {pipeline_mode = #tpu.pipeline_mode<synchronous>, transform_indices = @transform_6, window_bounds = array<i64: 1, 32>}, {transform_indices = @transform_7, window_bounds = array<i64: 2, 32>}]} {
    %c0 = arith.constant 0 : index
    %c0_0 = arith.constant 0 : index
    %0 = vector.load %arg1[%c0, %c0_0] : memref<2x16xf32, #tpu.memory_space<vmem>>, vector<2x16xf32>
    %1 = arith.truncf %0 : vector<2x16xf32> to vector<2x16xbf16>
    %c0_1 = arith.constant 0 : index
    %c0_2 = arith.constant 0 : index
    %2 = vector.load %arg2[%c0_1, %c0_2] : memref<16x64xbf16, #tpu.memory_space<vmem>>, vector<16x64xbf16>
    %cst = arith.constant dense<0.000000e+00> : vector<2x64xf32>
    %3 = tpu.matmul %1, %2, %cst {dimension_numbers = #tpu.dot_dimension_numbers<[1], [0], [0], [1], [0, 0, 1, 1], [], []>} : vector<2x16xbf16>, vector<16x64xbf16>, vector<2x64xf32> -> vector<2x64xf32>
    %c0_3 = arith.constant 0 : index
    %c0_4 = arith.constant 0 : index
    %4 = vector.load %arg3[%c0_3, %c0_4] : memref<1x64xf32, #tpu.memory_space<vmem>>, vector<1x64xf32>
    %5 = vector.broadcast %4 : vector<1x64xf32> to vector<2x64xf32>
    %6 = arith.addf %3, %5 : vector<2x64xf32>
    %cst_5 = arith.constant 0.000000e+00 : f32
    %7 = vector.broadcast %cst_5 : f32 to vector<2x64xf32>
    %8 = arith.maximumf %6, %7 : vector<2x64xf32>
    %9 = arith.truncf %8 : vector<2x64xf32> to vector<2x64xbf16>
    %c0_6 = arith.constant 0 : index
    %c0_7 = arith.constant 0 : index
    %10 = vector.load %arg4[%c0_6, %c0_7] : memref<64x64xbf16, #tpu.memory_space<vmem>>, vector<64x64xbf16>
    %cst_8 = arith.constant dense<0.000000e+00> : vector<2x64xf32>
    %11 = tpu.matmul %9, %10, %cst_8 {dimension_numbers = #tpu.dot_dimension_numbers<[1], [0], [0], [1], [0, 0, 1, 1], [], []>} : vector<2x64xbf16>, vector<64x64xbf16>, vector<2x64xf32> -> vector<2x64xf32>
    %c0_9 = arith.constant 0 : index
    %c0_10 = arith.constant 0 : index
    %12 = vector.load %arg5[%c0_9, %c0_10] : memref<1x64xf32, #tpu.memory_space<vmem>>, vector<1x64xf32>
    %13 = vector.broadcast %12 : vector<1x64xf32> to vector<2x64xf32>
    %14 = arith.addf %11, %13 : vector<2x64xf32>
    %cst_11 = arith.constant 0.000000e+00 : f32
    %15 = vector.broadcast %cst_11 : f32 to vector<2x64xf32>
    %16 = arith.maximumf %14, %15 : vector<2x64xf32>
    %17 = arith.truncf %16 : vector<2x64xf32> to vector<2x64xbf16>
    %c0_12 = arith.constant 0 : index
    %c0_13 = arith.constant 0 : index
    %18 = vector.load %arg6[%c0_12, %c0_13] : memref<64x32xbf16, #tpu.memory_space<vmem>>, vector<64x32xbf16>
    %cst_14 = arith.constant dense<0.000000e+00> : vector<2x32xf32>
    %19 = tpu.matmul %17, %18, %cst_14 {dimension_numbers = #tpu.dot_dimension_numbers<[1], [0], [0], [1], [0, 0, 1, 1], [], []>} : vector<2x64xbf16>, vector<64x32xbf16>, vector<2x32xf32> -> vector<2x32xf32>
    %c0_15 = arith.constant 0 : index
    %c0_16 = arith.constant 0 : index
    %20 = vector.load %arg7[%c0_15, %c0_16] : memref<1x32xf32, #tpu.memory_space<vmem>>, vector<1x32xf32>
    %21 = vector.broadcast %20 : vector<1x32xf32> to vector<2x32xf32>
    %22 = arith.addf %19, %21 : vector<2x32xf32>
    %23 = arith.truncf %22 : vector<2x32xf32> to vector<2x32xbf16>
    %c0_17 = arith.constant 0 : index
    %c0_18 = arith.constant 0 : index
    %24 = vector.load %arg8[%c0_17, %c0_18] : memref<2x32xbf16, #tpu.memory_space<vmem>>, vector<2x32xbf16>
    tpu.vector_store %arg8[%c0_17, %c0_18], %23 {strides = array<i32>} : memref<2x32xbf16, #tpu.memory_space<vmem>>, vector<2x32xbf16>,
    return
  }
  func.func @transform_0(%arg0: i32) -> (i32, i32) {
    %c0_i32 = arith.constant 0 : i32
    %c0_i32_0 = arith.constant 0 : i32
    return %arg0, %c0_i32 : i32, i32
  }
  func.func @transform_1(%arg0: i32) -> (i32, i32) {
    %c0_i32 = arith.constant 0 : i32
    %c0_i32_0 = arith.constant 0 : i32
    %c0_i32_1 = arith.constant 0 : i32
    return %c0_i32, %c0_i32_0 : i32, i32
  }
  func.func @transform_2(%arg0: i32) -> (i32, i32) {
    %c0_i32 = arith.constant 0 : i32
    %c0_i32_0 = arith.constant 0 : i32
    %c0_i32_1 = arith.constant 0 : i32
    return %c0_i32, %c0_i32_0 : i32, i32
  }
  func.func @transform_3(%arg0: i32) -> (i32, i32) {
    %c0_i32 = arith.constant 0 : i32
    %c0_i32_0 = arith.constant 0 : i32
    %c0_i32_1 = arith.constant 0 : i32
    return %c0_i32, %c0_i32_0 : i32, i32
  }
  func.func @transform_4(%arg0: i32) -> (i32, i32) {
    %c0_i32 = arith.constant 0 : i32
    %c0_i32_0 = arith.constant 0 : i32
    %c0_i32_1 = arith.constant 0 : i32
    return %c0_i32, %c0_i32_0 : i32, i32
  }
  func.func @transform_5(%arg0: i32) -> (i32, i32) {
    %c0_i32 = arith.constant 0 : i32
    %c0_i32_0 = arith.constant 0 : i32
    %c0_i32_1 = arith.constant 0 : i32
    return %c0_i32, %c0_i32_0 : i32, i32
  }
  func.func @transform_6(%arg0: i32) -> (i32, i32) {
    %c0_i32 = arith.constant 0 : i32
    %c0_i32_0 = arith.constant 0 : i32
    %c0_i32_1 = arith.constant 0 : i32
    return %c0_i32, %c0_i32_0 : i32, i32
  }
  func.func @transform_7(%arg0: i32) -> (i32, i32) {
    %c0_i32 = arith.constant 0 : i32
    %c0_i32_0 = arith.constant 0 : i32
    return %arg0, %c0_i32 : i32, i32
  }
}

</mosaic_0001>

<llo_original>
// kernel: q_network_forward.1
$region0: #{q_network_forward.1}
  #allocation0 [shape = 'u32[]', space=smem, size = 0x4, offset = 0x4, fixed_abs, tag = 'smem constant byte address 0x4 - core index']
  #allocation1 [shape = 'u32[144,128]{1,0:T(1,128)}', space=vmem, size = 0x12000, scoped, tag = 'internal scratch']
  %s0 = inlined_call_operand.vmem [shape: f32[2,16], index: 0, kind: input, shape index: {}]
  %s1 = inlined_call_operand.vmem [shape: bf16[16,64], index: 1, kind: input, shape index: {}]
  %s2 = inlined_call_operand.vmem [shape: f32[1,64], index: 2, kind: input, shape index: {}]
  %s3 = inlined_call_operand.vmem [shape: bf16[64,64], index: 3, kind: input, shape index: {}]
  %s4 = inlined_call_operand.vmem [shape: f32[1,64], index: 4, kind: input, shape index: {}]
  %s5 = inlined_call_operand.vmem [shape: bf16[64,32], index: 5, kind: input, shape index: {}]
  %s6 = inlined_call_operand.vmem [shape: f32[1,32], index: 6, kind: input, shape index: {}]
  %s7 = inlined_call_operand.vmem [shape: bf16[2,32], index: 7, kind: output, shape index: {}]
  %s8 = sld [smem:[#allocation0]]
  $region38: #{q_network_forward.1} parent=0
    _
  %s10 = ssub.s32 1, %s8
  %s11 = scalar_select 0, %s10, %s8
  // Predicated region
  $region2: #{q_network_forward.1} parent=0 // pred_check
    _
  $region3: #{q_network_forward.1} parent=0 // pred_check_branch
    %13 = sbr.rel (0) target = $region5
  $region4: #{q_network_forward.1} parent=0 // pred_region
    _
  $region5: #{q_network_forward.1} parent=0 // pred_fallthru
    _
  // Predicated region
  $region6: #{q_network_forward.1} parent=0 // pred_check
    _
  $region7: #{q_network_forward.1} parent=0 // pred_check_branch
    %15 = sbr.rel (0) target = $region9
  $region8: #{q_network_forward.1} parent=0 // pred_region
    _
  $region9: #{q_network_forward.1} parent=0 // pred_fallthru
    _
  // Predicated region
  $region10: #{q_network_forward.1} parent=0 // pred_check
    _
  $region11: #{q_network_forward.1} parent=0 // pred_check_branch
    %17 = sbr.rel (0) target = $region13
  $region12: #{q_network_forward.1} parent=0 // pred_region
    _
  $region13: #{q_network_forward.1} parent=0 // pred_fallthru
    _
  // Predicated region
  $region14: #{q_network_forward.1} parent=0 // pred_check
    _
  $region15: #{q_network_forward.1} parent=0 // pred_check_branch
    %19 = sbr.rel (0) target = $region17
  $region16: #{q_network_forward.1} parent=0 // pred_region
    _
  $region17: #{q_network_forward.1} parent=0 // pred_fallthru
    _
  // Predicated region
  $region18: #{q_network_forward.1} parent=0 // pred_check
    _
  $region19: #{q_network_forward.1} parent=0 // pred_check_branch
    %21 = sbr.rel (0) target = $region21
  $region20: #{q_network_forward.1} parent=0 // pred_region
    _
  $region21: #{q_network_forward.1} parent=0 // pred_fallthru
    _
  // Predicated region
  $region22: #{q_network_forward.1} parent=0 // pred_check
    _
  $region23: #{q_network_forward.1} parent=0 // pred_check_branch
    %23 = sbr.rel (0) target = $region25
  $region24: #{q_network_forward.1} parent=0 // pred_region
    _
  $region25: #{q_network_forward.1} parent=0 // pred_fallthru
    _
  // Predicated region
  $region26: #{q_network_forward.1} parent=0 // pred_check
    _
  $region27: #{q_network_forward.1} parent=0 // pred_check_branch
    %25 = sbr.rel (0) target = $region29
  $region28: #{q_network_forward.1} parent=0 // pred_region
    _
  $region29: #{q_network_forward.1} parent=0 // pred_fallthru
    _
  %v27 = vld [vmem:[%s0] sm:$0x3]
  %v28 = vpack.c.bf16 %v27, %v27
  %v29 = vld [vmem:[%s1] sm:$0xf]
  %v30 = vld [vmem:[%s1 + $0x4] sm:$0xf]
  %v31 = vld [vmem:[%s2] sm:$0x1]
  %v33 = vlaneseq
  %v34 = vshrl.u32 %v33, 7
  %v35 = vsub.s32 0, %v34
  %v36 = vrot.slane %v31, %v35
  %v40 = vunpack.c.l.b16 %v29
  %v41 = vunpack.c.l.b16 %v30
  %v42 = vpack.c.b16 %v41, %v40
  %vm44 = vcmask 130048
  %v46 = vsel %vm44, %v28, 0
  %48 = vmatprep.subr.bf16.mxu0 0
  %49 = vmatpush1.bf16.msra.mxu0 0
  %50 = vmatprep.subr.bf16.mxu0 0
  %51 = vmatpush1.bf16.msra.mxu0 0
  %52 = vmatprep.subr.bf16.mxu0 0
  %53 = vmatpush1.bf16.msra.mxu0 0
  %54 = vmatprep.subr.bf16.mxu0 0
  %55 = vmatpush1.bf16.msra.mxu0 0
  %56 = vmatprep.subr.bf16.mxu0 0
  %57 = vmatpush1.bf16.msra.mxu0 0
  %58 = vmatprep.subr.bf16.mxu0 0
  %59 = vmatpush1.bf16.msra.mxu0 0
  %60 = vmatprep.subr.bf16.mxu0 0
  %61 = vmatpush1.bf16.msra.mxu0 0
  %62 = vmatprep.subr.bf16.mxu0 0
  %63 = vmatpush1.bf16.msra.mxu0 %v42
  %64 = vmatprep.subr.bf16.mxu0 0
  %65 = vmatpush2.bf16.msra.mxu0 0
  %66 = vmatprep.subr.bf16.mxu0 0
  %67 = vmatpush2.bf16.msra.mxu0 0
  %68 = vmatprep.subr.bf16.mxu0 0
  %69 = vmatpush2.bf16.msra.mxu0 0
  %70 = vmatprep.subr.bf16.mxu0 0
  %71 = vmatpush2.bf16.msra.mxu0 0
  %72 = vmatprep.subr.bf16.mxu0 0
  %73 = vmatpush2.bf16.msra.mxu0 0
  %74 = vmatprep.subr.bf16.mxu0 0
  %75 = vmatpush2.bf16.msra.mxu0 0
  %76 = vmatprep.subr.bf16.mxu0 0
  %77 = vmatpush2.bf16.msra.mxu0 0
  %78 = vmatprep.subr.bf16.mxu0 0
  %79 = vmatpush2.bf16.msra.mxu0 0
  %80 = vmatprep.mubr.bf16.mxu0 0
  %81 = vmatmul.mubr.bf16.gmra.mxu0 %v46
  %v82 = vpop.f32.mrf.mxu0
  %v83 = vadd.f32 %v36, %v82
  %v84 = vpop.f32.mrf.mxu0
  %v85 = vpop.f32.mrf.mxu0
  %v86 = vpop.f32.mrf.mxu0
  %87 = vdwg.mxu0
  %v88 = vmax.f32 %v83, 0.0
  %v89 = vpack.c.bf16 %v88, %v88
  %v90 = vld [vmem:[%s3] sm:$0xf]
  %v91 = vld [vmem:[%s3 + $0x4] sm:$0xf]
  %v92 = vld [vmem:[%s3 + $0x8] sm:$0xf]
  %v93 = vld [vmem:[%s3 + $0xc] sm:$0xf]
  %v94 = vld [vmem:[%s3 + $0x10] sm:$0xf]
  %v95 = vld [vmem:[%s3 + $0x14] sm:$0xf]
  %v96 = vld [vmem:[%s3 + $0x18] sm:$0xf]
  %v97 = vld [vmem:[%s3 + $0x1c] sm:$0xf]
  %v98 = vld [vmem:[%s4] sm:$0x1]
  %v100 = vlaneseq
  %v101 = vshrl.u32 %v100, 7
  %v102 = vsub.s32 0, %v101
  %v103 = vrot.slane %v98, %v102
  %v113 = vunpack.c.l.b16 %v90
  %v114 = vunpack.c.l.b16 %v91
  %v115 = vunpack.c.l.b16 %v92
  %v116 = vunpack.c.l.b16 %v93
  %v117 = vunpack.c.l.b16 %v94
  %v118 = vunpack.c.l.b16 %v95
  %v119 = vunpack.c.l.b16 %v96
  %v120 = vunpack.c.l.b16 %v97
  %v121 = vpack.c.b16 %v114, %v113
  %v122 = vpack.c.b16 %v116, %v115
  %v123 = vpack.c.b16 %v118, %v117
  %v124 = vpack.c.b16 %v120, %v119
  %vm129 = vcmask 523264
  %v131 = vsel %vm129, %v89, 0
  %133 = vmatprep.subr.bf16.mxu0 0
  %134 = vmatpush1.bf16.msra.mxu0 0
  %135 = vmatprep.subr.bf16.mxu0 0
  %136 = vmatpush1.bf16.msra.mxu0 0
  %137 = vmatprep.subr.bf16.mxu0 0
  %138 = vmatpush1.bf16.msra.mxu0 0
  %139 = vmatprep.subr.bf16.mxu0 0
  %140 = vmatpush1.bf16.msra.mxu0 0
  %141 = vmatprep.subr.bf16.mxu0 0
  %142 = vmatpush1.bf16.msra.mxu0 %v124
  %143 = vmatprep.subr.bf16.mxu0 0
  %144 = vmatpush1.bf16.msra.mxu0 %v123
  %145 = vmatprep.subr.bf16.mxu0 0
  %146 = vmatpush1.bf16.msra.mxu0 %v122
  %147 = vmatprep.subr.bf16.mxu0 0
  %148 = vmatpush1.bf16.msra.mxu0 %v121
  %149 = vmatprep.subr.bf16.mxu0 0
  %150 = vmatpush2.bf16.msra.mxu0 0
  %151 = vmatprep.subr.bf16.mxu0 0
  %152 = vmatpush2.bf16.msra.mxu0 0
  %153 = vmatprep.subr.bf16.mxu0 0
  %154 = vmatpush2.bf16.msra.mxu0 0
  %155 = vmatprep.subr.bf16.mxu0 0
  %156 = vmatpush2.bf16.msra.mxu0 0
  %157 = vmatprep.subr.bf16.mxu0 0
  %158 = vmatpush2.bf16.msra.mxu0 0
  %159 = vmatprep.subr.bf16.mxu0 0
  %160 = vmatpush2.bf16.msra.mxu0 0
  %161 = vmatprep.subr.bf16.mxu0 0
  %162 = vmatpush2.bf16.msra.mxu0 0
  %163 = vmatprep.subr.bf16.mxu0 0
  %164 = vmatpush2.bf16.msra.mxu0 0
  %165 = vmatprep.mubr.bf16.mxu0 0
  %166 = vmatmul.mubr.bf16.gmra.mxu0 %v131
  %v167 = vpop.f32.mrf.mxu0
  %v168 = vadd.f32 %v103, %v167
  %v169 = vpop.f32.mrf.mxu0
  %v170 = vpop.f32.mrf.mxu0
  %v171 = vpop.f32.mrf.mxu0
  %172 = vdwg.mxu0
  %v173 = vmax.f32 %v168, 0.0
  %v174 = vpack.c.bf16 %v173, %v173
  %v175 = vld [vmem:[%s5] sm:$0xf]
  %v176 = vld [vmem:[%s5 + $0x4] sm:$0xf]
  %v177 = vld [vmem:[%s5 + $0x8] sm:$0xf]
  %v178 = vld [vmem:[%s5 + $0xc] sm:$0xf]
  %v179 = vld [vmem:[%s5 + $0x10] sm:$0xf]
  %v180 = vld [vmem:[%s5 + $0x14] sm:$0xf]
  %v181 = vld [vmem:[%s5 + $0x18] sm:$0xf]
  %v182 = vld [vmem:[%s5 + $0x1c] sm:$0xf]
  %v183 = vld [vmem:[%s6] sm:$0x1]
  %v185 = vlaneseq
  %v186 = vshrl.u32 %v185, 7
  %v187 = vsub.s32 0, %v186
  %v188 = vrot.slane %v183, %v187
  %v198 = vunpack.c.l.b16 %v175
  %v199 = vunpack.c.l.b16 %v176
  %v200 = vunpack.c.l.b16 %v177
  %v201 = vunpack.c.l.b16 %v178
  %v202 = vunpack.c.l.b16 %v179
  %v203 = vunpack.c.l.b16 %v180
  %v204 = vunpack.c.l.b16 %v181
  %v205 = vunpack.c.l.b16 %v182
  %v206 = vpack.c.b16 %v199, %v198
  %v207 = vpack.c.b16 %v201, %v200
  %v208 = vpack.c.b16 %v203, %v202
  %v209 = vpack.c.b16 %v205, %v204
  %v215 = vsel %vm129, %v174, 0
  %217 = vmatprep.subr.bf16.mxu0 0
  %218 = vmatpush1.bf16.msra.mxu0 0
  %219 = vmatprep.subr.bf16.mxu0 0
  %220 = vmatpush1.bf16.msra.mxu0 0
  %221 = vmatprep.subr.bf16.mxu0 0
  %222 = vmatpush1.bf16.msra.mxu0 0
  %223 = vmatprep.subr.bf16.mxu0 0
  %224 = vmatpush1.bf16.msra.mxu0 0
  %225 = vmatprep.subr.bf16.mxu0 0
  %226 = vmatpush1.bf16.msra.mxu0 %v209
  %227 = vmatprep.subr.bf16.mxu0 0
  %228 = vmatpush1.bf16.msra.mxu0 %v208
  %229 = vmatprep.subr.bf16.mxu0 0
  %230 = vmatpush1.bf16.msra.mxu0 %v207
  %231 = vmatprep.subr.bf16.mxu0 0
  %232 = vmatpush1.bf16.msra.mxu0 %v206
  %233 = vmatprep.subr.bf16.mxu0 0
  %234 = vmatpush2.bf16.msra.mxu0 0
  %235 = vmatprep.subr.bf16.mxu0 0
  %236 = vmatpush2.bf16.msra.mxu0 0
  %237 = vmatprep.subr.bf16.mxu0 0
  %238 = vmatpush2.bf16.msra.mxu0 0
  %239 = vmatprep.subr.bf16.mxu0 0
  %240 = vmatpush2.bf16.msra.mxu0 0
  %241 = vmatprep.subr.bf16.mxu0 0
  %242 = vmatpush2.bf16.msra.mxu0 0
  %243 = vmatprep.subr.bf16.mxu0 0
  %244 = vmatpush2.bf16.msra.mxu0 0
  %245 = vmatprep.subr.bf16.mxu0 0
  %246 = vmatpush2.bf16.msra.mxu0 0
  %247 = vmatprep.subr.bf16.mxu0 0
  %248 = vmatpush2.bf16.msra.mxu0 0
  %249 = vmatprep.mubr.bf16.mxu0 0
  %250 = vmatmul.mubr.bf16.gmra.mxu0 %v215
  %v251 = vpop.f32.mrf.mxu0
  %v252 = vadd.f32 %v188, %v251
  %v253 = vpop.f32.mrf.mxu0
  %v254 = vpop.f32.mrf.mxu0
  %v255 = vpop.f32.mrf.mxu0
  %256 = vdwg.mxu0
  %v257 = vpack.c.bf16 %v252, %v252
  %vm258 = vcmask 253952
  %259 = vst.msk [vmem:[%s7] sm:$0x1] %vm258, %v257
  // Predicated region
  $region30: #{q_network_forward.1} parent=0 // pred_check
    _
  $region31: #{q_network_forward.1} parent=0 // pred_check_branch
    %261 = sbr.rel (0) target = $region33
  $region32: #{q_network_forward.1} parent=0 // pred_region
    _
  $region33: #{q_network_forward.1} parent=0 // pred_fallthru
    _
  // Predicated region
  $region34: #{q_network_forward.1} parent=0 // pred_check
    _
  $region35: #{q_network_forward.1} parent=0 // pred_check_branch
    %263 = sbr.rel (0) target = $region37
  $region36: #{q_network_forward.1} parent=0 // pred_region
    _
  $region37: #{q_network_forward.1} parent=0 // pred_fallthru
    _

</llo_original>
